<compile_context>
chip_gen: v6e
topology: v6e:2x2x1
jax: 0.10.0
libtpu: 0.0.40
codegen_flags: <defaults>
</compile_context>

<pallas_src>
import functools

import jax
import jax.numpy as jnp
from jax.experimental import pallas as pl
from jax.experimental.pallas import tpu as pltpu


# ---------------------------------------------------------------------------
# Kernel
# ---------------------------------------------------------------------------
def _rmsnorm_linear_kernel(scale_ref, x_ref, nw_ref, wq_ref, b_ref, o_ref,
                           codes_ref, rs_ref, *, eps, int8_mxu):
    # scale_ref: (1,)  f32 SMEM   -- per-tensor weight dequant scale (1/ws)
    # x_ref:     (tm, H)          -- activation row tile (fetched once per row tile)
    # nw_ref:    (1, H)  f32      -- RMSNorm weight (resident)
    # wq_ref:    (H, tn) int8     -- pre-quantized, pre-transposed ternary weight codes
    # b_ref:     (1, tn) f32      -- linear bias tile
    # o_ref:     (tm, tn)         -- output tile
    # codes_ref: (tm, H) scratch  -- cached activation quant codes (int8 or bf16)
    # rs_ref:    (tm, 1) scratch  -- cached per-row dequant scale

    # --- RMSNorm + activation quant: only once per row tile, cached across j ---
    @pl.when(pl.program_id(1) == 0)
    def _():
        x = x_ref[...].astype(jnp.float32)
        var = jnp.mean(x * x, axis=-1, keepdims=True)
        y = x * jax.lax.rsqrt(var + eps) * nw_ref[...].astype(jnp.float32)
        amax = jnp.maximum(jnp.max(jnp.abs(y), axis=-1, keepdims=True), 1e-5)
        codes = jnp.clip(jnp.round(y * (127.0 / amax)), -128.0, 127.0)
        codes_ref[...] = codes.astype(codes_ref.dtype)
        # 1/a_scale == amax/127 exactly; per-tensor weight dequant scale folded in.
        rs_ref[...] = amax * (scale_ref[0] * (1.0 / 127.0))

    codes = codes_ref[...]
    if int8_mxu:
        # int8 x int8 -> int32 on the integer MXU (exact); dequant on the output tile.
        acc = jnp.dot(codes, wq_ref[...],
                      preferred_element_type=jnp.int32).astype(jnp.float32)
    else:
        # bf16 MXU path (v7x): upcast the int8 ternary tile in-kernel (codes are exact
        # in bf16: activations in [-128,127], weights in {-1,0,1}).
        acc = jnp.dot(codes, wq_ref[...].astype(jnp.bfloat16),
                      preferred_element_type=jnp.float32)

    o_ref[...] = (acc * rs_ref[...] + b_ref[...]).astype(o_ref.dtype)


# ---------------------------------------------------------------------------
# Helpers
# ---------------------------------------------------------------------------
def _round_up(n, m):
    return ((n + m - 1) // m) * m


def _supports_int8_mxu():
    # v5*/v6* MXUs run int8 natively; v7x has no integer MXU (use the bf16 path there).
    try:
        kind = jax.devices()[0].device_kind.lower()
    except Exception:
        return False
    return ("v5" in kind) or ("v6" in kind)


def _vmem_capacity_bytes():
    try:
        return int(pltpu.get_tpu_info().vmem_capacity_bytes)
    except Exception:
        return 64 * 1024 * 1024  # conservative fallback (v7x per-TC VMEM)


def quantize_linear_weight(linear_weight):
    """Per-tensor 1.58-bit ternary fake-quant of an nn.Linear weight (O, H).

    Call ONCE at weight-load time (the weight is constant across forward calls).
    Returns (wqt, inv_ws): int8 ternary codes pre-transposed to (H, O) and the
    per-tensor dequant scale (1/ws) as a (1,) f32 array.
    """
    w32 = linear_weight.astype(jnp.float32)
    ws = 1.0 / jnp.maximum(jnp.mean(jnp.abs(w32)), 1e-5)
    codes = jnp.clip(jnp.round(w32 * ws), -1.0, 1.0)
    wqt = codes.T.astype(jnp.int8)                      # (H, O), exact in int8
    inv_ws = (1.0 / ws).reshape(1).astype(jnp.float32)  # output-side dequant scale
    return wqt, inv_ws


# ---------------------------------------------------------------------------
# Wrapper
# ---------------------------------------------------------------------------
def rmsnorm_linear(x, norm_weight, linear_weight, linear_bias, *, eps=1e-5,
                   tm=1024, tn=512, quantized_weight=None, use_int8_mxu=None,
                   vmem_limit_bytes=None):
    """x: (..., H); norm_weight: (H,); linear_weight: (O, H); linear_bias: (O,) or None.

    quantized_weight: optional (wqt_int8, inv_ws) from quantize_linear_weight(),
    computed once at load time (preferred).  If the model hands bf16 activations the
    x HBM/VMEM traffic halves automatically; the norm math is always done in f32.
    """
    orig_shape = x.shape
    H = x.shape[-1]
    x2 = x.reshape(-1, H)
    M = x2.shape[0]

    if quantized_weight is None:
        # NOTE: prefer quantize_linear_weight() at load time; doing it here re-reads,
        # quantizes and transposes the full weight on every forward call.
        quantized_weight = quantize_linear_weight(linear_weight)
    wqt, inv_ws = quantized_weight
    O = wqt.shape[1]

    if M == 0:
        return jnp.zeros(orig_shape[:-1] + (O,), dtype=x.dtype)

    # ---- output-feature padding to a lane-dense multiple of 128 ----
    O_pad = _round_up(O, 128)
    if O_pad != O:
        wqt = jnp.pad(wqt, ((0, 0), (0, O_pad - O)))
    bias = (jnp.zeros((O,), jnp.float32) if linear_bias is None
            else linear_bias.astype(jnp.float32)).reshape(1, O)
    if O_pad != O:
        bias = jnp.pad(bias, ((0, 0), (0, O_pad - O)))

    nw = norm_weight.reshape(1, H).astype(jnp.float32)

    if use_int8_mxu is None:
        use_int8_mxu = _supports_int8_mxu()

    # ---- VMEM budget & tile sizes (chip-adaptive) ----
    if vmem_limit_bytes is None:
        cap = _vmem_capacity_bytes()
        vmem_limit_bytes = min(int(cap * 0.85), 100 * 1024 * 1024)

    tn_eff = min(_round_up(tn, 128), O_pad)
    while O_pad % tn_eff != 0:
        tn_eff -= 128

    tm_eff = min(_round_up(tm, 8), _round_up(M, 8))
    xb = x2.dtype.itemsize
    ob = x.dtype.itemsize
    cb = 1 if use_int8_mxu else 2

    def _vmem_bytes(tm_):
        return (2 * tm_ * H * xb            # x tile, double-buffered
                + 2 * H * tn_eff            # int8 weight tile, double-buffered
                + 2 * tm_ * tn_eff * ob     # output tile, double-buffered
                + 2 * tn_eff * 4            # bias tile
                + H * 4                     # norm weight
                + tm_ * H * cb + 4 * tm_)   # scratch (codes + row scale)

    budget = int(vmem_limit_bytes * 0.75)
    while tm_eff > 128 and _vmem_bytes(tm_eff) > budget:
        tm_eff = _round_up(tm_eff // 2, 8)

    grid = (pl.cdiv(M, tm_eff), O_pad // tn_eff)   # ragged last row tile is masked

    def _build_and_run(int8_mode):
        code_dtype = jnp.int8 if int8_mode else jnp.bfloat16
        kernel = functools.partial(_rmsnorm_linear_kernel, eps=eps, int8_mxu=int8_mode)
        return pl.pallas_call(
            kernel,
            out_shape=jax.ShapeDtypeStruct((M, O_pad), x.dtype),
            grid=grid,
            in_specs=[
                pl.BlockSpec(memory_space=pltpu.MemorySpace.SMEM),      # inv_ws scalar
                pl.BlockSpec((tm_eff, H), lambda i, j: (i, 0)),         # x rows (1 DMA / row tile)
                pl.BlockSpec((1, H), lambda i, j: (0, 0)),              # norm weight (resident)
                pl.BlockSpec((H, tn_eff), lambda i, j: (0, j)),         # int8 weight codes
                pl.BlockSpec((1, tn_eff), lambda i, j: (0, j)),         # bias tile
            ],
            out_specs=pl.BlockSpec((tm_eff, tn_eff), lambda i, j: (i, j)),
            scratch_shapes=[
                pltpu.VMEM((tm_eff, H), code_dtype),    # cached activation codes
                pltpu.VMEM((tm_eff, 1), jnp.float32),   # cached per-row dequant scale
            ],
            compiler_params=pltpu.CompilerParams(
                dimension_semantics=("parallel", "arbitrary"),
                vmem_limit_bytes=vmem_limit_bytes,
            ),
        )(inv_ws, x2, nw, wqt, bias)

    if use_int8_mxu:
        try:
            out = _build_and_run(True)
        except Exception:
            # Fallback if the integer-MXU lowering is unavailable on this chip/toolchain.
            out = _build_and_run(False)
    else:
        out = _build_and_run(False)

    if O_pad != O:
        out = out[:, :O]
    return out.reshape(orig_shape[:-1] + (O,))


# ---------------------------------------------------------------------------
# Pure-JAX reference (mirrors the PyTorch forward exactly, f32 throughout)
# ---------------------------------------------------------------------------
def _reference(x, norm_weight, linear_weight, linear_bias, eps=1e-5):
    H = x.shape[-1]
    x2 = x.reshape(-1, H).astype(jnp.float32)
    var = jnp.mean(x2 * x2, axis=-1, keepdims=True)
    y = x2 * jax.lax.rsqrt(var + eps) * norm_weight[None, :].astype(jnp.float32)
    a_scale = 127.0 / jnp.maximum(jnp.max(jnp.abs(y), axis=-1, keepdims=True), 1e-5)
    yq = jnp.clip(jnp.round(y * a_scale), -128.0, 127.0) / a_scale
    w32 = linear_weight.astype(jnp.float32)
    ws = 1.0 / jnp.maximum(jnp.mean(jnp.abs(w32)), 1e-5)
    wq = jnp.clip(jnp.round(w32 * ws), -1.0, 1.0) / ws
    out = yq @ wq.T + linear_bias[None, :].astype(jnp.float32)
    return out.reshape(x.shape[:-1] + (linear_weight.shape[0],)).astype(x.dtype)


if __name__ == "__main__":
    # Small, lane-dense shapes: batch=2, seq=128, hidden=128, out_features=256.
    # Demo tile sizes (tm=128, tn=128) give a 2x2 grid, exercising both the j==0
    # (compute + cache) and j>0 (cached codes, MXU-only) paths on both row tiles.
    B, T, H, O = 2, 128, 128, 256
    eps = 1e-5

    key = jax.random.PRNGKey(0)
    kx, kw, kb = jax.random.split(key, 3)

    x = jax.random.normal(kx, (B, T, H), dtype=jnp.float32)
    # RMSNormLinear.__init__: norm weight initialized to ones(hidden_size), bias=None.
    norm_weight = jnp.ones((H,), dtype=jnp.float32)
    # Deterministic synthetic linear layer params (passed in to forward()).
    linear_weight = jax.random.normal(kw, (O, H), dtype=jnp.float32) * 0.05
    linear_bias = jax.random.normal(kb, (O,), dtype=jnp.float32) * 0.1

    # Weight fake-quant done once (load time), outside the forward path.
    qweight = quantize_linear_weight(linear_weight)

    out = rmsnorm_linear(x, norm_weight, linear_weight, linear_bias, eps=eps,
                         tm=128, tn=128, quantized_weight=qweight)
    out = jax.block_until_ready(out)

    ref = _reference(x, norm_weight, linear_weight, linear_bias, eps=eps)
    assert out.shape == (B, T, O), out.shape
    max_err = float(jnp.max(jnp.abs(out - ref)))
    assert jnp.allclose(out, ref, atol=1e-4, rtol=1e-4), max_err

    print("KERNEL_OK")
</pallas_src>

<mosaic_0001>
module attributes {stable_mosaic.version = 11 : i64} {
  func.func @_rmsnorm_linear_kernel(%arg0: i32, %arg1: i32, %arg2: memref<1xf32, #tpu.memory_space<smem>>, %arg3: memref<128x128xf32, #tpu.memory_space<vmem>>, %arg4: memref<1x128xf32, #tpu.memory_space<vmem>>, %arg5: memref<128x128xi8, #tpu.memory_space<vmem>>, %arg6: memref<1x128xf32, #tpu.memory_space<vmem>>, %arg7: memref<128x128xf32, #tpu.memory_space<vmem>>, %arg8: memref<128x128xbf16, #tpu.memory_space<vmem>>, %arg9: memref<128x1xf32, #tpu.memory_space<vmem>>) attributes {dimension_semantics = [#tpu.dimension_semantics<parallel>, #tpu.dimension_semantics<arbitrary>], iteration_bounds = array<i64: 2, 2>, scalar_prefetch = 0 : i64, scratch_operands = 2 : i64, tpu.core_type = #tpu.core_type<tc>, window_params = [{transform_indices = @transform_0, window_bounds = array<i64: 1>}, {transform_indices = @transform_1, window_bounds = array<i64: 128, 128>}, {pipeline_mode = #tpu.pipeline_mode<synchronous>, transform_indices = @transform_2, window_bounds = array<i64: 1, 128>}, {transform_indices = @transform_3, window_bounds = array<i64: 128, 128>}, {transform_indices = @transform_4, window_bounds = array<i64: 1, 128>}, {transform_indices = @transform_5, window_bounds = array<i64: 128, 128>}]} {
    %c0_i32 = arith.constant 0 : i32
    %0 = arith.cmpi eq, %arg1, %c0_i32 : i32
    %1 = arith.extui %0 : i1 to i32
    %c0_i32_0 = arith.constant 0 : i32
    %2 = arith.cmpi ne, %1, %c0_i32_0 : i32
    scf.if %2 {
      %c0_10 = arith.constant 0 : index
      %c0_11 = arith.constant 0 : index
      %14 = vector.load %arg3[%c0_10, %c0_11] : memref<128x128xf32, #tpu.memory_space<vmem>>, vector<128x128xf32>
      %15 = arith.mulf %14, %14 : vector<128x128xf32>
      %cst_12 = arith.constant dense<0.000000e+00> : vector<128xf32>
      %16 = vector.multi_reduction <add>, %15, %cst_12 [1] : vector<128x128xf32> to vector<128xf32>
      %17 = vector.shape_cast %16 : vector<128xf32> to vector<128x1xf32>
      %cst_13 = arith.constant 1.280000e+02 : f32
      %18 = vector.broadcast %cst_13 : f32 to vector<128x1xf32>
      %19 = arith.divf %17, %18 : vector<128x1xf32>
      %cst_14 = arith.constant 9.99999974E-6 : f32
      %20 = vector.broadcast %cst_14 : f32 to vector<128x1xf32>
      %21 = arith.addf %19, %20 : vector<128x1xf32>
      %22 = math.rsqrt %21 : vector<128x1xf32>
      %23 = vector.broadcast %22 : vector<128x1xf32> to vector<128x128xf32>
      %24 = arith.mulf %14, %23 : vector<128x128xf32>
      %c0_15 = arith.constant 0 : index
      %c0_16 = arith.constant 0 : index
      %25 = vector.load %arg4[%c0_15, %c0_16] : memref<1x128xf32, #tpu.memory_space<vmem>>, vector<1x128xf32>
      %26 = vector.broadcast %25 : vector<1x128xf32> to vector<128x128xf32>
      %27 = arith.mulf %24, %26 : vector<128x128xf32>
      %28 = math.absf %27 : vector<128x128xf32>
      %cst_17 = arith.constant dense<0xFF800000> : vector<128xf32>
      %29 = vector.multi_reduction <maximumf>, %28, %cst_17 [1] : vector<128x128xf32> to vector<128xf32>
      %30 = vector.shape_cast %29 : vector<128xf32> to vector<128x1xf32>
      %cst_18 = arith.constant 9.99999974E-6 : f32
      %31 = vector.broadcast %cst_18 : f32 to vector<128x1xf32>
      %32 = arith.maximumf %30, %31 : vector<128x1xf32>
      %cst_19 = arith.constant 1.270000e+02 : f32
      %33 = vector.broadcast %cst_19 : f32 to vector<128x1xf32>
      %34 = arith.divf %33, %32 : vector<128x1xf32>
      %35 = vector.broadcast %34 : vector<128x1xf32> to vector<128x128xf32>
      %36 = arith.mulf %27, %35 : vector<128x128xf32>
      %37 = math.roundeven %36 : vector<128x128xf32>
      %cst_20 = arith.constant -1.280000e+02 : f32
      %cst_21 = arith.constant 1.270000e+02 : f32
      %38 = vector.broadcast %cst_20 : f32 to vector<128x128xf32>
      %39 = arith.maximumf %38, %37 : vector<128x128xf32>
      %40 = vector.broadcast %cst_21 : f32 to vector<128x128xf32>
      %41 = arith.minimumf %40, %39 : vector<128x128xf32>
      %42 = arith.truncf %41 : vector<128x128xf32> to vector<128x128xbf16>
      %c0_22 = arith.constant 0 : index
      %c0_23 = arith.constant 0 : index
      %43 = vector.load %arg8[%c0_22, %c0_23] : memref<128x128xbf16, #tpu.memory_space<vmem>>, vector<128x128xbf16>
      tpu.vector_store %arg8[%c0_22, %c0_23], %42 {strides = array<i32>} : memref<128x128xbf16, #tpu.memory_space<vmem>>, vector<128x128xbf16>,
      %c0_24 = arith.constant 0 : index
      %44 = memref.load %arg2[%c0_24] : memref<1xf32, #tpu.memory_space<smem>>
      %cst_25 = arith.constant 0.00787401571 : f32
      %45 = arith.mulf %44, %cst_25 : f32
      %46 = vector.broadcast %45 : f32 to vector<128x1xf32>
      %47 = arith.mulf %32, %46 : vector<128x1xf32>
      %c0_26 = arith.constant 0 : index
      %c0_27 = arith.constant 0 : index
      %48 = vector.load %arg9[%c0_26, %c0_27] : memref<128x1xf32, #tpu.memory_space<vmem>>, vector<128x1xf32>
      tpu.vector_store %arg9[%c0_26, %c0_27], %47 {strides = array<i32>} : memref<128x1xf32, #tpu.memory_space<vmem>>, vector<128x1xf32>,
    } else {
    }
    %c0 = arith.constant 0 : index
    %c0_1 = arith.constant 0 : index
    %3 = vector.load %arg8[%c0, %c0_1] : memref<128x128xbf16, #tpu.memory_space<vmem>>, vector<128x128xbf16>
    %c0_2 = arith.constant 0 : index
    %c0_3 = arith.constant 0 : index
    %4 = vector.load %arg5[%c0_2, %c0_3] : memref<128x128xi8, #tpu.memory_space<vmem>>, vector<128x128xi8>
    %5 = arith.sitofp %4 : vector<128x128xi8> to vector<128x128xbf16>
    %cst = arith.constant dense<0.000000e+00> : vector<128x128xf32>
    %6 = tpu.matmul %3, %5, %cst {dimension_numbers = #tpu.dot_dimension_numbers<[1], [0], [0], [1], [0, 0, 1, 1], [], []>} : vector<128x128xbf16>, vector<128x128xbf16>, vector<128x128xf32> -> vector<128x128xf32>
    %c0_4 = arith.constant 0 : index
    %c0_5 = arith.constant 0 : index
    %7 = vector.load %arg9[%c0_4, %c0_5] : memref<128x1xf32, #tpu.memory_space<vmem>>, vector<128x1xf32>
    %8 = vector.broadcast %7 : vector<128x1xf32> to vector<128x128xf32>
    %9 = arith.mulf %6, %8 : vector<128x128xf32>
    %c0_6 = arith.constant 0 : index
    %c0_7 = arith.constant 0 : index
    %10 = vector.load %arg6[%c0_6, %c0_7] : memref<1x128xf32, #tpu.memory_space<vmem>>, vector<1x128xf32>
    %11 = vector.broadcast %10 : vector<1x128xf32> to vector<128x128xf32>
    %12 = arith.addf %9, %11 : vector<128x128xf32>
    %c0_8 = arith.constant 0 : index
    %c0_9 = arith.constant 0 : index
    %13 = vector.load %arg7[%c0_8, %c0_9] : memref<128x128xf32, #tpu.memory_space<vmem>>, vector<128x128xf32>
    tpu.vector_store %arg7[%c0_8, %c0_9], %12 {strides = array<i32>} : memref<128x128xf32, #tpu.memory_space<vmem>>, vector<128x128xf32>,
    return
  }
  func.func @transform_0(%arg0: i32, %arg1: i32) -> i32 {
    %c0_i32 = arith.constant 0 : i32
    %c0_i32_0 = arith.constant 0 : i32
    return %c0_i32 : i32
  }
  func.func @transform_1(%arg0: i32, %arg1: i32) -> (i32, i32) {
    %c0_i32 = arith.constant 0 : i32
    %c0_i32_0 = arith.constant 0 : i32
    return %arg0, %c0_i32 : i32, i32
  }
  func.func @transform_2(%arg0: i32, %arg1: i32) -> (i32, i32) {
    %c0_i32 = arith.constant 0 : i32
    %c0_i32_0 = arith.constant 0 : i32
    %c0_i32_1 = arith.constant 0 : i32
    return %c0_i32, %c0_i32_0 : i32, i32
  }
  func.func @transform_3(%arg0: i32, %arg1: i32) -> (i32, i32) {
    %c0_i32 = arith.constant 0 : i32
    %c0_i32_0 = arith.constant 0 : i32
    return %c0_i32, %arg1 : i32, i32
  }
  func.func @transform_4(%arg0: i32, %arg1: i32) -> (i32, i32) {
    %c0_i32 = arith.constant 0 : i32
    %c0_i32_0 = arith.constant 0 : i32
    return %c0_i32, %arg1 : i32, i32
  }
  func.func @transform_5(%arg0: i32, %arg1: i32) -> (i32, i32) {
    %c0_i32 = arith.constant 0 : i32
    return %arg0, %arg1 : i32, i32
  }
}

</mosaic_0001>

<llo_original>
// kernel: tpu_custom_call.1
$region0: #{tpu_custom_call.1}
  #allocation0 [shape = 'u32[]', space=smem, size = 0x4, offset = 0x4, fixed_abs, tag = 'smem constant byte address 0x4 - core index']
  #allocation1 [shape = 'u32[144,128]{1,0:T(1,128)}', space=vmem, size = 0x12000, scoped, tag = 'internal scratch']
  #allocation2 [shape = 'bf16[128,128]{1,0:T(8,128)(2,1)}', space=vmem, size = 0x8000, scoped, tag = 'scratch operand']
  #allocation3 [shape = 'f32[128,1]{1,0:T(8,128)}', space=vmem, size = 0x10000, scoped, tag = 'scratch operand']
  #allocation4 [shape = 'f32[1]{0:T(128)S(6)}', space=smem, size = 0x200, scoped, tag = 'scoped memory for tpu_custom_call.1']
  %s0 = inlined_call_operand.<no memory space> [shape: f32[1], index: 0, kind: input, shape index: {}]
  %s1 = inlined_call_operand.hbm [shape: f32[256,128], index: 1, kind: input, shape index: {}]
  %s2 = inlined_call_operand.vmem [shape: f32[1,128], index: 2, kind: input, shape index: {}]
  %s3 = inlined_call_operand.hbm [shape: s8[128,256], index: 3, kind: input, shape index: {}]
  %s4 = inlined_call_operand.vmem [shape: f32[1,256], index: 4, kind: input, shape index: {}]
  %s5 = inlined_call_operand.hbm [shape: f32[256,256], index: 5, kind: output, shape index: {}]
  %s6 = sld [smem:[#allocation0]]
  $region65: #{tpu_custom_call.1} parent=0
    _
  %s8 = ssub.s32 1, %s6
  %s9 = scalar_select 0, %s8, %s6
  %10 = sst [smem:[#allocation4]] %s0
  $region1: #{tpu_custom_call.1} parent=0
    #allocation5 [shape = 'u8[131072]{0}', space=vmem, size = 0x20000, scoped, tag = 'input window, operand 1']
    #allocation6 [shape = 's32[2]{0}', space=sflag, size = 0x8, scoped, tag = 'scoped memory for tpu_custom_call.1']
    #allocation7 [shape = 's32[2]{0}', space=sflag, size = 0x8, scoped, tag = 'scoped memory for tpu_custom_call.1']
    #allocation8 [shape = 'u8[32768]{0}', space=vmem, size = 0x8000, scoped, tag = 'input window, operand 3']
    #allocation9 [shape = 's32[2]{0}', space=sflag, size = 0x8, scoped, tag = 'scoped memory for tpu_custom_call.1']
    #allocation10 [shape = 'u8[131072]{0}', space=vmem, size = 0x20000, scoped, tag = 'output window, operand 0']
    %11 = vsyncpa [#allocation6], 0
    %s12 = scalar_lea.sflag [#allocation6], 1
    %13 = vsyncpa %s12, 0
    %14 = vsyncpa [#allocation9], 0
    %s15 = scalar_lea.sflag [#allocation9], 1
    %16 = vsyncpa %s15, 0
    %17 = vsyncpa [#allocation7], 0
    %s18 = scalar_lea.sflag [#allocation7], 1
    %19 = vsyncpa %s18, 0
    loop: start=0, step=1, limit=6
    $region2: #{tpu_custom_call.1} parent=1 // loop_pre_header
      _
    $region3: #{tpu_custom_call.1} parent=1 // loop_header
      %s21 = sphi 0, %s25
      %p22 = scmp.ge.s32.totalorder %s21, 6
      %s28 = sphi 0, %s40
      %s29 = sphi 0, %s36
      %s30 = sphi 0, %s28
      %s31 = sphi 0, %s29
      %s32 = sphi 0, %s30
      %s33 = sphi 0, %s31
      %s41 = sphi 0, %s41
      %s43 = sphi 0, %s41
      %s44 = sphi 0, %s43
      %s58 = sphi 0, %s44
      %s64 = sphi 0, %s66
      %s67 = sphi 0, %s64
      %s68 = sphi 0, %s67
      %s84 = sphi 0, %s68
      %s88 = sphi 0, %s88
      %s90 = sphi 0, %s88
      %s91 = sphi 0, %s90
      %s105 = sphi 0, %s91
      %s111 = sphi 0, %s113
      %s114 = sphi 0, %s111
      %s115 = sphi 0, %s114
      %s131 = sphi 0, %s115
      %s137 = sphi 0, %s139
      %s140 = sphi 0, %s137
      %s141 = sphi 0, %s140
      %s157 = sphi 0, %s141
      %s165 = sphi 0, %s167
      %s168 = sphi 0, %s165
      %s169 = sphi 0, %s168
      %s185 = sphi 0, %s169
    $region4: #{tpu_custom_call.1} parent=1 // loop_header_branch
      %24 = sbr.rel (%p22) target = $region8
    $region5: #{tpu_custom_call.1} parent=1 // loop_body
      %s26 = ssub.s32 %s21, 1
      %s27 = ssub.s32 %s21, 2
      %s34 = sadd.s32 1, %s29
      %p35 = scmp.ge.s32.totalorder %s34, 2
      %s36 = scalar_select %p35, 0, %s34
      %s37 = sadd.s32 1, %s28
      %s38 = scalar_select %p35, %s37, %s28
      %p39 = scmp.ge.s32.totalorder %s38, 2
      %s40 = scalar_select %p39, 0, %s38
      %s42 = sadd.s32 %s41, 1
      %p45 = scmp.eq.s32.totalorder %s21, 3
      %p46 = scmp.ne.s32.totalorder %s41, %s43
      %p47 = scmp.eq.s32.totalorder %s21, 0
      %p48 = por %p46, %p47
      %p49 = scmp.ne.s32.totalorder %s41, %s43
      %p50 = scmp.eq.s32.totalorder %s26, 3
      %p51 = por %p49, %p50
      %p52 = scmp.ne.s32.totalorder %s43, %s44
      %p53 = scmp.eq.s32.totalorder %s26, 0
      %p54 = por %p52, %p53
      %p55 = scmp.ne.s32.totalorder %s43, %s44
      %p56 = scmp.eq.s32.totalorder %s27, 3
      %p57 = por %p55, %p56
      %p59 = scmp.ne.s32.totalorder %s44, %s58
      %p60 = scmp.eq.s32.totalorder %s27, 0
      %p61 = por %p59, %p60
      %s62 = ssub.s32 %s28, %s40
      %p63 = scmp.eq.s32.totalorder %s62, 0
      %s65 = sadd.s32 %s64, 1
      %s66 = scalar_select %p63, %s64, %s65
      %p69 = pneg %p63
      %p70 = scmp.eq.s32.totalorder %s21, 3
      %p71 = por %p69, %p70
      %p72 = scmp.ne.s32.totalorder %s64, %s67
      %p73 = scmp.eq.s32.totalorder %s21, 0
      %p74 = por %p72, %p73
      %p75 = scmp.ne.s32.totalorder %s64, %s67
      %p76 = scmp.eq.s32.totalorder %s26, 3
      %p77 = por %p75, %p76
      %p78 = scmp.ne.s32.totalorder %s67, %s68
      %p79 = scmp.eq.s32.totalorder %s26, 0
      %p80 = por %p78, %p79
      %p81 = scmp.ne.s32.totalorder %s67, %s68
      %p82 = scmp.eq.s32.totalorder %s27, 3
      %p83 = por %p81, %p82
      %p85 = scmp.ne.s32.totalorder %s68, %s84
      %p86 = scmp.eq.s32.totalorder %s27, 0
      %p87 = por %p85, %p86
      %s89 = sadd.s32 %s88, 1
      %p92 = scmp.eq.s32.totalorder %s21, 3
      %p93 = scmp.ne.s32.totalorder %s88, %s90
      %p94 = scmp.eq.s32.totalorder %s21, 0
      %p95 = por %p93, %p94
      %p96 = scmp.ne.s32.totalorder %s88, %s90
      %p97 = scmp.eq.s32.totalorder %s26, 3
      %p98 = por %p96, %p97
      %p99 = scmp.ne.s32.totalorder %s90, %s91
      %p100 = scmp.eq.s32.totalorder %s26, 0
      %p101 = por %p99, %p100
      %p102 = scmp.ne.s32.totalorder %s90, %s91
      %p103 = scmp.eq.s32.totalorder %s27, 3
      %p104 = por %p102, %p103
      %p106 = scmp.ne.s32.totalorder %s91, %s105
      %p107 = scmp.eq.s32.totalorder %s27, 0
      %p108 = por %p106, %p107
      %s109 = ssub.s32 %s29, %s36
      %p110 = scmp.eq.s32.totalorder %s109, 0
      %s112 = sadd.s32 %s111, 1
      %s113 = scalar_select %p110, %s111, %s112
      %p116 = pneg %p110
      %p117 = scmp.eq.s32.totalorder %s21, 3
      %p118 = por %p116, %p117
      %p119 = scmp.ne.s32.totalorder %s111, %s114
      %p120 = scmp.eq.s32.totalorder %s21, 0
      %p121 = por %p119, %p120
      %p122 = scmp.ne.s32.totalorder %s111, %s114
      %p123 = scmp.eq.s32.totalorder %s26, 3
      %p124 = por %p122, %p123
      %p125 = scmp.ne.s32.totalorder %s114, %s115
      %p126 = scmp.eq.s32.totalorder %s26, 0
      %p127 = por %p125, %p126
      %p128 = scmp.ne.s32.totalorder %s114, %s115
      %p129 = scmp.eq.s32.totalorder %s27, 3
      %p130 = por %p128, %p129
      %p132 = scmp.ne.s32.totalorder %s115, %s131
      %p133 = scmp.eq.s32.totalorder %s27, 0
      %p134 = por %p132, %p133
      %s135 = ssub.s32 %s29, %s36
      %p136 = scmp.eq.s32.totalorder %s135, 0
      %s138 = sadd.s32 %s137, 1
      %s139 = scalar_select %p136, %s137, %s138
      %p142 = pneg %p136
      %p143 = scmp.eq.s32.totalorder %s21, 3
      %p144 = por %p142, %p143
      %p145 = scmp.ne.s32.totalorder %s137, %s140
      %p146 = scmp.eq.s32.totalorder %s21, 0
      %p147 = por %p145, %p146
      %p148 = scmp.ne.s32.totalorder %s137, %s140
      %p149 = scmp.eq.s32.totalorder %s26, 3
      %p150 = por %p148, %p149
      %p151 = scmp.ne.s32.totalorder %s140, %s141
      %p152 = scmp.eq.s32.totalorder %s26, 0
      %p153 = por %p151, %p152
      %p154 = scmp.ne.s32.totalorder %s140, %s141
      %p155 = scmp.eq.s32.totalorder %s27, 3
      %p156 = por %p154, %p155
      %p158 = scmp.ne.s32.totalorder %s141, %s157
      %p159 = scmp.eq.s32.totalorder %s27, 0
      %p160 = por %p158, %p159
      %s161 = ssub.s32 %s28, %s40
      %s162 = ssub.s32 %s29, %s36
      %s163 = sor.u32 %s161, %s162
      %p164 = scmp.eq.s32.totalorder %s163, 0
      %s166 = sadd.s32 %s165, 1
      %s167 = scalar_select %p164, %s165, %s166
      %p170 = pneg %p164
      %p171 = scmp.eq.s32.totalorder %s21, 3
      %p172 = por %p170, %p171
      %p173 = scmp.ne.s32.totalorder %s165, %s168
      %p174 = scmp.eq.s32.totalorder %s21, 0
      %p175 = por %p173, %p174
      %p176 = scmp.ne.s32.totalorder %s165, %s168
      %p177 = scmp.eq.s32.totalorder %s26, 3
      %p178 = por %p176, %p177
      %p179 = scmp.ne.s32.totalorder %s168, %s169
      %p180 = scmp.eq.s32.totalorder %s26, 0
      %p181 = por %p179, %p180
      %p182 = scmp.ne.s32.totalorder %s168, %s169
      %p183 = scmp.eq.s32.totalorder %s27, 3
      %p184 = por %p182, %p183
      %p186 = scmp.ne.s32.totalorder %s169, %s185
      %p187 = scmp.eq.s32.totalorder %s27, 0
      %p188 = por %p186, %p187
      %p189 = scmp.le.s32.totalorder 1, %s21
      %p190 = scmp.lt.s32.totalorder %s21, 5
      %p191 = pnand %p189, %p190
      %p192 = pneg %p191
      // Predicated region
      $region9: #{tpu_custom_call.1} parent=5 // pred_check
        _
      $region10: #{tpu_custom_call.1} parent=5 // pred_check_branch
        %194 = sbr.rel (%p191) target = $region12
      $region11: #{tpu_custom_call.1} parent=5 // pred_region
        %s195 = ssub.s32 %s21, 1
        // Predicated region
        $region13: #{tpu_custom_call.1} parent=11 // pred_check
          %p196 = pneg %p54
        $region14: #{tpu_custom_call.1} parent=11 // pred_check_branch
          %198 = sbr.rel (%p196) target = $region16
        $region15: #{tpu_custom_call.1} parent=11 // pred_region
          _
        $region16: #{tpu_custom_call.1} parent=11 // pred_fallthru
          _
        // Predicated region
        $region17: #{tpu_custom_call.1} parent=11 // pred_check
          %p199 = pneg %p101
        $region18: #{tpu_custom_call.1} parent=11 // pred_check_branch
          %201 = sbr.rel (%p199) target = $region20
        $region19: #{tpu_custom_call.1} parent=11 // pred_region
          _
        $region20: #{tpu_custom_call.1} parent=11 // pred_fallthru
          _
      $region12: #{tpu_custom_call.1} parent=5 // pred_fallthru
        _
      %p202 = scmp.lt.s32.totalorder %s21, 4
      // Predicated region
      $region21: #{tpu_custom_call.1} parent=5 // pred_check
        %p203 = pneg %p202
      $region22: #{tpu_custom_call.1} parent=5 // pred_check_branch
        %205 = sbr.rel (%p203) target = $region24
      $region23: #{tpu_custom_call.1} parent=5 // pred_region
        // Predicated region
        $region25: #{tpu_custom_call.1} parent=23 // pred_check
          %p206 = pneg %p74
        $region26: #{tpu_custom_call.1} parent=23 // pred_check_branch
          %208 = sbr.rel (%p206) target = $region28
        $region27: #{tpu_custom_call.1} parent=23 // pred_region
          %s209 = sand.u32 %s64, 1
          %s210 = scalar_lea.sflag [#allocation6], %s209
          %s211 = sand.u32 %s64, 1
          %s212 = smul.addr %s211, 128
          %s213 = scalar_lea.vmem [#allocation5], %s212
          %s214 = smul.u32 16, %s28
          %s216 = ssub.s32 2048, 2048
          %217 = vsyncadd %s210, %s216
          %s218 = smul.addr %s214, 128
          %s219 = scalar_lea.hbm %s1, %s218
          %s220 = sshll.u32 %s213, 4
          %s221 = int_to_ptr.vmem [resolvable:$true] %s220
          %226 = dma.hbm_to_vmem [thread:$0]  %s219, 2048, %s221, %s210, 128, 128, 8
        $region28: #{tpu_custom_call.1} parent=23 // pred_fallthru
          _
        // Predicated region
        $region29: #{tpu_custom_call.1} parent=23 // pred_check
          %p227 = pneg %p121
        $region30: #{tpu_custom_call.1} parent=23 // pred_check_branch
          %229 = sbr.rel (%p227) target = $region32
        $region31: #{tpu_custom_call.1} parent=23 // pred_region
          %s230 = sand.u32 %s111, 1
          %s231 = scalar_lea.sflag [#allocation9], %s230
          %s232 = sand.u32 %s111, 1
          %s233 = smul.addr %s232, 32
          %s234 = scalar_lea.vmem [#allocation8], %s233
          %s236 = ssub.s32 512, 512
          %237 = vsyncadd %s231, %s236
          %s238 = smul.addr %s29, 128
          %s239 = scalar_lea.hbm %s3, %s238
          %s240 = sshll.u32 %s234, 4
          %s241 = int_to_ptr.vmem [resolvable:$true] %s240
          %246 = dma.hbm_to_vmem [thread:$0]  %s239, 512, %s241, %s231, 256, 128, 8
        $region32: #{tpu_custom_call.1} parent=23 // pred_fallthru
          _
        // Predicated region
        $region33: #{tpu_custom_call.1} parent=23 // pred_check
          %p247 = pneg %p147
        $region34: #{tpu_custom_call.1} parent=23 // pred_check_branch
          %249 = sbr.rel (%p247) target = $region36
        $region35: #{tpu_custom_call.1} parent=23 // pred_region
          %p250 = scmp.lt.s32.totalorder %s29, 1
          %s251 = scalar_select %p250, %s29, 1
          %s252 = scalar_lea.vmem %s4, %s251
        $region36: #{tpu_custom_call.1} parent=23 // pred_fallthru
          _
      $region24: #{tpu_custom_call.1} parent=5 // pred_fallthru
        _
      %p253 = scmp.le.s32.totalorder 1, %s21
      %p254 = scmp.lt.s32.totalorder %s21, 5
      %p255 = pnand %p253, %p254
      %p256 = pneg %p255
      // Predicated region
      $region37: #{tpu_custom_call.1} parent=5 // pred_check
        _
      $region38: #{tpu_custom_call.1} parent=5 // pred_check_branch
        %258 = sbr.rel (%p255) target = $region40
      $region39: #{tpu_custom_call.1} parent=5 // pred_region
        %s259 = ssub.s32 %s21, 1
        %s260 = sand.u32 %s67, 1
        %s261 = scalar_lea.sflag [#allocation6], %s260
        %s262 = sand.u32 %s67, 1
        %s263 = smul.addr %s262, 128
        %s264 = scalar_lea.vmem [#allocation5], %s263
        // Predicated region
        $region41: #{tpu_custom_call.1} parent=39 // pred_check
          %p265 = pneg %p80
        $region42: #{tpu_custom_call.1} parent=39 // pred_check_branch
          %267 = sbr.rel (%p265) target = $region44
        $region43: #{tpu_custom_call.1} parent=39 // pred_region
          %268 = dma.done %s261, 2048
        $region44: #{tpu_custom_call.1} parent=39 // pred_fallthru
          _
        %s269 = sand.u32 %s114, 1
        %s270 = scalar_lea.sflag [#allocation9], %s269
        %s271 = sand.u32 %s114, 1
        %s272 = smul.addr %s271, 32
        %s273 = scalar_lea.vmem [#allocation8], %s272
        // Predicated region
        $region45: #{tpu_custom_call.1} parent=39 // pred_check
          %p274 = pneg %p127
        $region46: #{tpu_custom_call.1} parent=39 // pred_check_branch
          %276 = sbr.rel (%p274) target = $region48
        $region47: #{tpu_custom_call.1} parent=39 // pred_region
          %277 = dma.done %s270, 512
        $region48: #{tpu_custom_call.1} parent=39 // pred_fallthru
          _
        %p278 = pneg %p54
        %p279 = pneg %p51
        %s280 = sand.u32 %s67, 1
        %s281 = scalar_lea.sflag [#allocation6], %s280
        %s282 = sand.u32 %s67, 1
        %s283 = smul.addr %s282, 128
        %s284 = scalar_lea.vmem [#allocation5], %s283
        %p285 = pneg %p80
        %p286 = pneg %p77
        %p287 = pneg %p101
        %p288 = pneg %p98
        %s289 = sand.u32 %s114, 1
        %s290 = scalar_lea.sflag [#allocation9], %s289
        %s291 = sand.u32 %s114, 1
        %s292 = smul.addr %s291, 32
        %s293 = scalar_lea.vmem [#allocation8], %s292
        %p294 = pneg %p127
        %p295 = pneg %p124
        %p296 = scmp.lt.s32.totalorder %s31, 1
        %s297 = scalar_select %p296, %s31, 1
        %s298 = scalar_lea.vmem %s4, %s297
        %p299 = pneg %p153
        %p300 = pneg %p150
        %p301 = pneg %p181
        %p302 = pneg %p178
        %s303 = sand.u32 %s168, 1
        %s304 = scalar_lea.sflag [#allocation7], %s303
        %s305 = sand.u32 %s168, 1
        %s306 = smul.addr %s305, 128
        %s307 = scalar_lea.vmem [#allocation10], %s306
        %s308 = smul.u32 16, %s30
        %p309 = scmp.lt.s32.totalorder %s31, 1
        %s310 = scalar_select %p309, %s31, 1
        %s311 = scalar_lea.vmem %s4, %s310
        %s312 = smul.u32 16, %s30
        %p314 = scmp.eq.s32.totalorder %s31, 0
        // Predicated region
        $region49: #{tpu_custom_call.1} parent=39 // pred_check
          %p315 = pneg %p314
        $region50: #{tpu_custom_call.1} parent=39 // pred_check_branch
          %317 = sbr.rel (%p315) target = $region52
        $region51: #{tpu_custom_call.1} parent=39 // pred_region
          %v318 = vld [vmem:[%s264] sm:$0xff]
          %v319 = vld [vmem:[%s264 + $0x8] sm:$0xff]
          %v320 = vld [vmem:[%s264 + $0x10] sm:$0xff]
          %v321 = vld [vmem:[%s264 + $0x18] sm:$0xff]
          %v322 = vld [vmem:[%s264 + $0x20] sm:$0xff]
          %v323 = vld [vmem:[%s264 + $0x28] sm:$0xff]
          %v324 = vld [vmem:[%s264 + $0x30] sm:$0xff]
          %v325 = vld [vmem:[%s264 + $0x38] sm:$0xff]
          %v326 = vld [vmem:[%s264 + $0x40] sm:$0xff]
          %v327 = vld [vmem:[%s264 + $0x48] sm:$0xff]
          %v328 = vld [vmem:[%s264 + $0x50] sm:$0xff]
          %v329 = vld [vmem:[%s264 + $0x58] sm:$0xff]
          %v330 = vld [vmem:[%s264 + $0x60] sm:$0xff]
          %v331 = vld [vmem:[%s264 + $0x68] sm:$0xff]
          %v332 = vld [vmem:[%s264 + $0x70] sm:$0xff]
          %v333 = vld [vmem:[%s264 + $0x78] sm:$0xff]
          %v334 = vmul.f32 %v318, %v318
          %v335 = vmul.f32 %v319, %v319
          %v336 = vmul.f32 %v320, %v320
          %v337 = vmul.f32 %v321, %v321
          %v338 = vmul.f32 %v322, %v322
          %v339 = vmul.f32 %v323, %v323
          %v340 = vmul.f32 %v324, %v324
          %v341 = vmul.f32 %v325, %v325
          %v342 = vmul.f32 %v326, %v326
          %v343 = vmul.f32 %v327, %v327
          %v344 = vmul.f32 %v328, %v328
          %v345 = vmul.f32 %v329, %v329
          %v346 = vmul.f32 %v330, %v330
          %v347 = vmul.f32 %v331, %v331
          %v348 = vmul.f32 %v332, %v332
          %v349 = vmul.f32 %v333, %v333
          %350 = vadd.xlane.f32.xlu0 %v334
          %v351 = vpop.xlane.xlu0 %350
          %352 = vadd.xlane.f32.xlu0 %v335
          %v353 = vpop.xlane.xlu0 %352
          %354 = vadd.xlane.f32.xlu0 %v336
          %v355 = vpop.xlane.xlu0 %354
          %356 = vadd.xlane.f32.xlu0 %v337
          %v357 = vpop.xlane.xlu0 %356
          %358 = vadd.xlane.f32.xlu0 %v338
          %v359 = vpop.xlane.xlu0 %358
          %360 = vadd.xlane.f32.xlu0 %v339
          %v361 = vpop.xlane.xlu0 %360
          %362 = vadd.xlane.f32.xlu0 %v340
          %v363 = vpop.xlane.xlu0 %362
          %364 = vadd.xlane.f32.xlu0 %v341
          %v365 = vpop.xlane.xlu0 %364
          %366 = vadd.xlane.f32.xlu0 %v342
          %v367 = vpop.xlane.xlu0 %366
          %368 = vadd.xlane.f32.xlu0 %v343
          %v369 = vpop.xlane.xlu0 %368
          %370 = vadd.xlane.f32.xlu0 %v344
          %v371 = vpop.xlane.xlu0 %370
          %372 = vadd.xlane.f32.xlu0 %v345
          %v373 = vpop.xlane.xlu0 %372
          %374 = vadd.xlane.f32.xlu0 %v346
          %v375 = vpop.xlane.xlu0 %374
          %376 = vadd.xlane.f32.xlu0 %v347
          %v377 = vpop.xlane.xlu0 %376
          %378 = vadd.xlane.f32.xlu0 %v348
          %v379 = vpop.xlane.xlu0 %378
          %380 = vadd.xlane.f32.xlu0 %v349
          %v381 = vpop.xlane.xlu0 %380
          %v382 = vrcp.pop 128.0
          %v383 = vmul.f32 %v351, %v382
          %v384 = vmul.f32 %v353, %v382
          %v385 = vmul.f32 %v355, %v382
          %v386 = vmul.f32 %v357, %v382
          %v387 = vmul.f32 %v359, %v382
          %v388 = vmul.f32 %v361, %v382
          %v389 = vmul.f32 %v363, %v382
          %v390 = vmul.f32 %v365, %v382
          %v391 = vmul.f32 %v367, %v382
          %v392 = vmul.f32 %v369, %v382
          %v393 = vmul.f32 %v371, %v382
          %v394 = vmul.f32 %v373, %v382
          %v395 = vmul.f32 %v375, %v382
          %v396 = vmul.f32 %v377, %v382
          %v397 = vmul.f32 %v379, %v382
          %v398 = vmul.f32 %v381, %v382
          %v399 = vadd.f32 %v383, 1e-05
          %v400 = vadd.f32 %v384, 1e-05
          %v401 = vadd.f32 %v385, 1e-05
          %v402 = vadd.f32 %v386, 1e-05
          %v403 = vadd.f32 %v387, 1e-05
          %v404 = vadd.f32 %v388, 1e-05
          %v405 = vadd.f32 %v389, 1e-05
          %v406 = vadd.f32 %v390, 1e-05
          %v407 = vadd.f32 %v391, 1e-05
          %v408 = vadd.f32 %v392, 1e-05
          %v409 = vadd.f32 %v393, 1e-05
          %v410 = vadd.f32 %v394, 1e-05
          %v411 = vadd.f32 %v395, 1e-05
          %v412 = vadd.f32 %v396, 1e-05
          %v413 = vadd.f32 %v397, 1e-05
          %v414 = vadd.f32 %v398, 1e-05
          %v415 = vrsqrt.pop %v399
          %v416 = vrsqrt.pop %v400
          %v417 = vrsqrt.pop %v401
          %v418 = vrsqrt.pop %v402
          %v419 = vrsqrt.pop %v403
          %v420 = vrsqrt.pop %v404
          %v421 = vrsqrt.pop %v405
          %v422 = vrsqrt.pop %v406
          %v423 = vrsqrt.pop %v407
          %v424 = vrsqrt.pop %v408
          %v425 = vrsqrt.pop %v409
          %v426 = vrsqrt.pop %v410
          %v427 = vrsqrt.pop %v411
          %v428 = vrsqrt.pop %v412
          %v429 = vrsqrt.pop %v413
          %v430 = vrsqrt.pop %v414
          %v431 = vmul.f32 %v318, %v415
          %v432 = vmul.f32 %v319, %v416
          %v433 = vmul.f32 %v320, %v417
          %v434 = vmul.f32 %v321, %v418
          %v435 = vmul.f32 %v322, %v419
          %v436 = vmul.f32 %v323, %v420
          %v437 = vmul.f32 %v324, %v421
          %v438 = vmul.f32 %v325, %v422
          %v439 = vmul.f32 %v326, %v423
          %v440 = vmul.f32 %v327, %v424
          %v441 = vmul.f32 %v328, %v425
          %v442 = vmul.f32 %v329, %v426
          %v443 = vmul.f32 %v330, %v427
          %v444 = vmul.f32 %v331, %v428
          %v445 = vmul.f32 %v332, %v429
          %v446 = vmul.f32 %v333, %v430
          %v447 = vld [vmem:[%s2] sm:$0x1]
          %v449 = vlaneseq
          %v450 = vshrl.u32 %v449, 7
          %v451 = vsub.s32 0, %v450
          %v452 = vrot.slane %v447, %v451
          %v454 = vmul.f32 %v431, %v452
          %v455 = vmul.f32 %v432, %v452
          %v456 = vmul.f32 %v433, %v452
          %v457 = vmul.f32 %v434, %v452
          %v458 = vmul.f32 %v435, %v452
          %v459 = vmul.f32 %v436, %v452
          %v460 = vmul.f32 %v437, %v452
          %v461 = vmul.f32 %v438, %v452
          %v462 = vmul.f32 %v439, %v452
          %v463 = vmul.f32 %v440, %v452
          %v464 = vmul.f32 %v441, %v452
          %v465 = vmul.f32 %v442, %v452
          %v466 = vmul.f32 %v443, %v452
          %v467 = vmul.f32 %v444, %v452
          %v468 = vmul.f32 %v445, %v452
          %v469 = vmul.f32 %v446, %v452
          %v470 = vand.u32 2147483647, %v454
          %v471 = vand.u32 2147483647, %v455
          %v472 = vand.u32 2147483647, %v456
          %v473 = vand.u32 2147483647, %v457
          %v474 = vand.u32 2147483647, %v458
          %v475 = vand.u32 2147483647, %v459
          %v476 = vand.u32 2147483647, %v460
          %v477 = vand.u32 2147483647, %v461
          %v478 = vand.u32 2147483647, %v462
          %v479 = vand.u32 2147483647, %v463
          %v480 = vand.u32 2147483647, %v464
          %v481 = vand.u32 2147483647, %v465
          %v482 = vand.u32 2147483647, %v466
          %v483 = vand.u32 2147483647, %v467
          %v484 = vand.u32 2147483647, %v468
          %v485 = vand.u32 2147483647, %v469
          %486 = vmax.xlane.f32.xlu0 %v470
          %v487 = vpop.xlane.xlu0 %486
          %488 = vmax.xlane.f32.xlu0 %v471
          %v489 = vpop.xlane.xlu0 %488
          %490 = vmax.xlane.f32.xlu0 %v472
          %v491 = vpop.xlane.xlu0 %490
          %492 = vmax.xlane.f32.xlu0 %v473
          %v493 = vpop.xlane.xlu0 %492
          %494 = vmax.xlane.f32.xlu0 %v474
          %v495 = vpop.xlane.xlu0 %494
          %496 = vmax.xlane.f32.xlu0 %v475
          %v497 = vpop.xlane.xlu0 %496
          %498 = vmax.xlane.f32.xlu0 %v476
          %v499 = vpop.xlane.xlu0 %498
          %500 = vmax.xlane.f32.xlu0 %v477
          %v501 = vpop.xlane.xlu0 %500
          %502 = vmax.xlane.f32.xlu0 %v478
          %v503 = vpop.xlane.xlu0 %502
          %504 = vmax.xlane.f32.xlu0 %v479
          %v505 = vpop.xlane.xlu0 %504
          %506 = vmax.xlane.f32.xlu0 %v480
          %v507 = vpop.xlane.xlu0 %506
          %508 = vmax.xlane.f32.xlu0 %v481
          %v509 = vpop.xlane.xlu0 %508
          %510 = vmax.xlane.f32.xlu0 %v482
          %v511 = vpop.xlane.xlu0 %510
          %512 = vmax.xlane.f32.xlu0 %v483
          %v513 = vpop.xlane.xlu0 %512
          %514 = vmax.xlane.f32.xlu0 %v484
          %v515 = vpop.xlane.xlu0 %514
          %516 = vmax.xlane.f32.xlu0 %v485
          %v517 = vpop.xlane.xlu0 %516
          %v518 = vmax.f32 %v487, 1e-05
          %v519 = vmax.f32 %v489, 1e-05
          %v520 = vmax.f32 %v491, 1e-05
          %v521 = vmax.f32 %v493, 1e-05
          %v522 = vmax.f32 %v495, 1e-05
          %v523 = vmax.f32 %v497, 1e-05
          %v524 = vmax.f32 %v499, 1e-05
          %v525 = vmax.f32 %v501, 1e-05
          %v526 = vmax.f32 %v503, 1e-05
          %v527 = vmax.f32 %v505, 1e-05
          %v528 = vmax.f32 %v507, 1e-05
          %v529 = vmax.f32 %v509, 1e-05
          %v530 = vmax.f32 %v511, 1e-05
          %v531 = vmax.f32 %v513, 1e-05
          %v532 = vmax.f32 %v515, 1e-05
          %v533 = vmax.f32 %v517, 1e-05
          %v534 = vrcp.pop %v518
          %v535 = vmul.f32 127.0, %v534
          %v536 = vrcp.pop %v519
          %v537 = vmul.f32 127.0, %v536
          %v538 = vrcp.pop %v520
          %v539 = vmul.f32 127.0, %v538
          %v540 = vrcp.pop %v521
          %v541 = vmul.f32 127.0, %v540
          %v542 = vrcp.pop %v522
          %v543 = vmul.f32 127.0, %v542
          %v544 = vrcp.pop %v523
          %v545 = vmul.f32 127.0, %v544
          %v546 = vrcp.pop %v524
          %v547 = vmul.f32 127.0, %v546
          %v548 = vrcp.pop %v525
          %v549 = vmul.f32 127.0, %v548
          %v550 = vrcp.pop %v526
          %v551 = vmul.f32 127.0, %v550
          %v552 = vrcp.pop %v527
          %v553 = vmul.f32 127.0, %v552
          %v554 = vrcp.pop %v528
          %v555 = vmul.f32 127.0, %v554
          %v556 = vrcp.pop %v529
          %v557 = vmul.f32 127.0, %v556
          %v558 = vrcp.pop %v530
          %v559 = vmul.f32 127.0, %v558
          %v560 = vrcp.pop %v531
          %v561 = vmul.f32 127.0, %v560
          %v562 = vrcp.pop %v532
          %v563 = vmul.f32 127.0, %v562
          %v564 = vrcp.pop %v533
          %v565 = vmul.f32 127.0, %v564
          %v566 = vmul.f32 %v454, %v535
          %v567 = vmul.f32 %v455, %v537
          %v568 = vmul.f32 %v456, %v539
          %v569 = vmul.f32 %v457, %v541
          %v570 = vmul.f32 %v458, %v543
          %v571 = vmul.f32 %v459, %v545
          %v572 = vmul.f32 %v460, %v547
          %v573 = vmul.f32 %v461, %v549
          %v574 = vmul.f32 %v462, %v551
          %v575 = vmul.f32 %v463, %v553
          %v576 = vmul.f32 %v464, %v555
          %v577 = vmul.f32 %v465, %v557
          %v578 = vmul.f32 %v466, %v559
          %v579 = vmul.f32 %v467, %v561
          %v580 = vmul.f32 %v468, %v563
          %v581 = vmul.f32 %v469, %v565
          %v582 = vround.ne.pseudo %v566
          %v583 = vround.ne.pseudo %v567
          %v584 = vround.ne.pseudo %v568
          %v585 = vround.ne.pseudo %v569
          %v586 = vround.ne.pseudo %v570
          %v587 = vround.ne.pseudo %v571
          %v588 = vround.ne.pseudo %v572
          %v589 = vround.ne.pseudo %v573
          %v590 = vround.ne.pseudo %v574
          %v591 = vround.ne.pseudo %v575
          %v592 = vround.ne.pseudo %v576
          %v593 = vround.ne.pseudo %v577
          %v594 = vround.ne.pseudo %v578
          %v595 = vround.ne.pseudo %v579
          %v596 = vround.ne.pseudo %v580
          %v597 = vround.ne.pseudo %v581
          %v598 = vmax.f32 %v582, -128.0
          %v599 = vmax.f32 %v583, -128.0
          %v600 = vmax.f32 %v584, -128.0
          %v601 = vmax.f32 %v585, -128.0
          %v602 = vmax.f32 %v586, -128.0
          %v603 = vmax.f32 %v587, -128.0
          %v604 = vmax.f32 %v588, -128.0
          %v605 = vmax.f32 %v589, -128.0
          %v606 = vmax.f32 %v590, -128.0
          %v607 = vmax.f32 %v591, -128.0
          %v608 = vmax.f32 %v592, -128.0
          %v609 = vmax.f32 %v593, -128.0
          %v610 = vmax.f32 %v594, -128.0
          %v611 = vmax.f32 %v595, -128.0
          %v612 = vmax.f32 %v596, -128.0
          %v613 = vmax.f32 %v597, -128.0
          %v614 = vmin.f32 %v598, 127.0
          %v615 = vmin.f32 %v599, 127.0
          %v616 = vmin.f32 %v600, 127.0
          %v617 = vmin.f32 %v601, 127.0
          %v618 = vmin.f32 %v602, 127.0
          %v619 = vmin.f32 %v603, 127.0
          %v620 = vmin.f32 %v604, 127.0
          %v621 = vmin.f32 %v605, 127.0
          %v622 = vmin.f32 %v606, 127.0
          %v623 = vmin.f32 %v607, 127.0
          %v624 = vmin.f32 %v608, 127.0
          %v625 = vmin.f32 %v609, 127.0
          %v626 = vmin.f32 %v610, 127.0
          %v627 = vmin.f32 %v611, 127.0
          %v628 = vmin.f32 %v612, 127.0
          %v629 = vmin.f32 %v613, 127.0
          %v630 = vpack.c.bf16 %v615, %v614
          %v631 = vpack.c.bf16 %v617, %v616
          %v632 = vpack.c.bf16 %v619, %v618
          %v633 = vpack.c.bf16 %v621, %v620
          %v634 = vpack.c.bf16 %v623, %v622
          %v635 = vpack.c.bf16 %v625, %v624
          %v636 = vpack.c.bf16 %v627, %v626
          %v637 = vpack.c.bf16 %v629, %v628
          %v646 = vunpack.c.l.b16 %v630
          %v647 = vunpack.c.h.b16 %v630
          %v648 = vunpack.c.l.b16 %v631
          %v649 = vunpack.c.h.b16 %v631
          %v650 = vunpack.c.l.b16 %v632
          %v651 = vunpack.c.h.b16 %v632
          %v652 = vunpack.c.l.b16 %v633
          %v653 = vunpack.c.h.b16 %v633
          %v654 = vunpack.c.l.b16 %v634
          %v655 = vunpack.c.h.b16 %v634
          %v656 = vunpack.c.l.b16 %v635
          %v657 = vunpack.c.h.b16 %v635
          %v658 = vunpack.c.l.b16 %v636
          %v659 = vunpack.c.h.b16 %v636
          %v660 = vunpack.c.l.b16 %v637
          %v661 = vunpack.c.h.b16 %v637
          %v662 = vpack.c.b16 %v646, %v646
          %v663 = vpack.c.b16 %v647, %v647
          %v664 = vpack.c.b16 %v648, %v648
          %v665 = vpack.c.b16 %v649, %v649
          %v666 = vpack.c.b16 %v650, %v650
          %v667 = vpack.c.b16 %v651, %v651
          %v668 = vpack.c.b16 %v652, %v652
          %v669 = vpack.c.b16 %v653, %v653
          %v670 = vpack.c.b16 %v654, %v654
          %v671 = vpack.c.b16 %v655, %v655
          %v672 = vpack.c.b16 %v656, %v656
          %v673 = vpack.c.b16 %v657, %v657
          %v674 = vpack.c.b16 %v658, %v658
          %v675 = vpack.c.b16 %v659, %v659
          %v676 = vpack.c.b16 %v660, %v660
          %v677 = vpack.c.b16 %v661, %v661
          %694 = vst [vmem:[#allocation2] sm:$0xf] %v662
          %695 = vst [vmem:[#allocation2 + $0x4] sm:$0xf] %v663
          %696 = vst [vmem:[#allocation2 + $0x8] sm:$0xf] %v664
          %697 = vst [vmem:[#allocation2 + $0xc] sm:$0xf] %v665
          %698 = vst [vmem:[#allocation2 + $0x10] sm:$0xf] %v666
          %699 = vst [vmem:[#allocation2 + $0x14] sm:$0xf] %v667
          %700 = vst [vmem:[#allocation2 + $0x18] sm:$0xf] %v668
          %701 = vst [vmem:[#allocation2 + $0x1c] sm:$0xf] %v669
          %702 = vst [vmem:[#allocation2 + $0x20] sm:$0xf] %v670
          %703 = vst [vmem:[#allocation2 + $0x24] sm:$0xf] %v671
          %704 = vst [vmem:[#allocation2 + $0x28] sm:$0xf] %v672
          %705 = vst [vmem:[#allocation2 + $0x2c] sm:$0xf] %v673
          %706 = vst [vmem:[#allocation2 + $0x30] sm:$0xf] %v674
          %707 = vst [vmem:[#allocation2 + $0x34] sm:$0xf] %v675
          %708 = vst [vmem:[#allocation2 + $0x38] sm:$0xf] %v676
          %709 = vst [vmem:[#allocation2 + $0x3c] sm:$0xf] %v677
          %s710 = sld [smem:[#allocation4]]
          %s711 = smul.f32 %s710, 0.007874016
          %v712 = vstv %s711
          %v713 = vmul.f32 %v518, %v712
          %v714 = vmul.f32 %v519, %v712
          %v715 = vmul.f32 %v520, %v712
          %v716 = vmul.f32 %v521, %v712
          %v717 = vmul.f32 %v522, %v712
          %v718 = vmul.f32 %v523, %v712
          %v719 = vmul.f32 %v524, %v712
          %v720 = vmul.f32 %v525, %v712
          %v721 = vmul.f32 %v526, %v712
          %v722 = vmul.f32 %v527, %v712
          %v723 = vmul.f32 %v528, %v712
          %v724 = vmul.f32 %v529, %v712
          %v725 = vmul.f32 %v530, %v712
          %v726 = vmul.f32 %v531, %v712
          %v727 = vmul.f32 %v532, %v712
          %v728 = vmul.f32 %v533, %v712
          %vm729 = vcmask 7168
          %730 = vst.msk [vmem:[#allocation3] sm:$0xff] %vm729, %v713
          %731 = vst.msk [vmem:[#allocation3 + $0x8] sm:$0xff] %vm729, %v714
          %732 = vst.msk [vmem:[#allocation3 + $0x10] sm:$0xff] %vm729, %v715
          %733 = vst.msk [vmem:[#allocation3 + $0x18] sm:$0xff] %vm729, %v716
          %734 = vst.msk [vmem:[#allocation3 + $0x20] sm:$0xff] %vm729, %v717
          %735 = vst.msk [vmem:[#allocation3 + $0x28] sm:$0xff] %vm729, %v718
          %736 = vst.msk [vmem:[#allocation3 + $0x30] sm:$0xff] %vm729, %v719
          %737 = vst.msk [vmem:[#allocation3 + $0x38] sm:$0xff] %vm729, %v720
          %738 = vst.msk [vmem:[#allocation3 + $0x40] sm:$0xff] %vm729, %v721
          %739 = vst.msk [vmem:[#allocation3 + $0x48] sm:$0xff] %vm729, %v722
          %740 = vst.msk [vmem:[#allocation3 + $0x50] sm:$0xff] %vm729, %v723
          %741 = vst.msk [vmem:[#allocation3 + $0x58] sm:$0xff] %vm729, %v724
          %742 = vst.msk [vmem:[#allocation3 + $0x60] sm:$0xff] %vm729, %v725
          %743 = vst.msk [vmem:[#allocation3 + $0x68] sm:$0xff] %vm729, %v726
          %744 = vst.msk [vmem:[#allocation3 + $0x70] sm:$0xff] %vm729, %v727
          %745 = vst.msk [vmem:[#allocation3 + $0x78] sm:$0xff] %vm729, %v728
        $region52: #{tpu_custom_call.1} parent=39 // pred_fallthru
          _
        %v746 = vld [vmem:[#allocation2] sm:$0xf]
        %v747 = vld [vmem:[#allocation2 + $0x4] sm:$0xf]
        %v748 = vld [vmem:[#allocation2 + $0x8] sm:$0xf]
        %v749 = vld [vmem:[#allocation2 + $0xc] sm:$0xf]
        %v750 = vld [vmem:[#allocation2 + $0x10] sm:$0xf]
        %v751 = vld [vmem:[#allocation2 + $0x14] sm:$0xf]
        %v752 = vld [vmem:[#allocation2 + $0x18] sm:$0xf]
        %v753 = vld [vmem:[#allocation2 + $0x1c] sm:$0xf]
        %v754 = vld [vmem:[#allocation2 + $0x20] sm:$0xf]
        %v755 = vld [vmem:[#allocation2 + $0x24] sm:$0xf]
        %v756 = vld [vmem:[#allocation2 + $0x28] sm:$0xf]
        %v757 = vld [vmem:[#allocation2 + $0x2c] sm:$0xf]
        %v758 = vld [vmem:[#allocation2 + $0x30] sm:$0xf]
        %v759 = vld [vmem:[#allocation2 + $0x34] sm:$0xf]
        %v760 = vld [vmem:[#allocation2 + $0x38] sm:$0xf]
        %v761 = vld [vmem:[#allocation2 + $0x3c] sm:$0xf]
        %v762 = vld [vmem:[%s273] sm:$0xff]
        %v763 = vld [vmem:[%s273 + $0x8] sm:$0xff]
        %v764 = vld [vmem:[%s273 + $0x10] sm:$0xff]
        %v765 = vld [vmem:[%s273 + $0x18] sm:$0xff]
        %v766 = vunpack.c.l.s8.bf16 %v762
        %v767 = vunpack.c.h.s8.bf16 %v762
        %v768 = vunpack.c.l.s8.bf16 %v763
        %v769 = vunpack.c.h.s8.bf16 %v763
        %v770 = vunpack.c.l.s8.bf16 %v764
        %v771 = vunpack.c.h.s8.bf16 %v764
        %v772 = vunpack.c.l.s8.bf16 %v765
        %v773 = vunpack.c.h.s8.bf16 %v765
        %v790 = vunpack.c.l.b16 %v746
        %v791 = vunpack.c.l.b16 %v747
        %v792 = vunpack.c.l.b16 %v748
        %v793 = vunpack.c.l.b16 %v749
        %v794 = vunpack.c.l.b16 %v750
        %v795 = vunpack.c.l.b16 %v751
        %v796 = vunpack.c.l.b16 %v752
        %v797 = vunpack.c.l.b16 %v753
        %v798 = vunpack.c.l.b16 %v754
        %v799 = vunpack.c.l.b16 %v755
        %v800 = vunpack.c.l.b16 %v756
        %v801 = vunpack.c.l.b16 %v757
        %v802 = vunpack.c.l.b16 %v758
        %v803 = vunpack.c.l.b16 %v759
        %v804 = vunpack.c.l.b16 %v760
        %v805 = vunpack.c.l.b16 %v761
        %v806 = vpack.c.b16 %v791, %v790
        %v807 = vpack.c.b16 %v793, %v792
        %v808 = vpack.c.b16 %v795, %v794
        %v809 = vpack.c.b16 %v797, %v796
        %v810 = vpack.c.b16 %v799, %v798
        %v811 = vpack.c.b16 %v801, %v800
        %v812 = vpack.c.b16 %v803, %v802
        %v813 = vpack.c.b16 %v805, %v804
        %822 = vmatprep.subr.bf16.mxu0 0
        %823 = vmatpush1.bf16.msra.mxu0 %v773
        %824 = vmatprep.subr.bf16.mxu0 0
        %825 = vmatpush1.bf16.msra.mxu0 %v772
        %826 = vmatprep.subr.bf16.mxu0 0
        %827 = vmatpush1.bf16.msra.mxu0 %v771
        %828 = vmatprep.subr.bf16.mxu0 0
        %829 = vmatpush1.bf16.msra.mxu0 %v770
        %830 = vmatprep.subr.bf16.mxu0 0
        %831 = vmatpush1.bf16.msra.mxu0 %v769
        %832 = vmatprep.subr.bf16.mxu0 0
        %833 = vmatpush1.bf16.msra.mxu0 %v768
        %834 = vmatprep.subr.bf16.mxu0 0
        %835 = vmatpush1.bf16.msra.mxu0 %v767
        %836 = vmatprep.subr.bf16.mxu0 0
        %837 = vmatpush1.bf16.msra.mxu0 %v766
        %838 = vmatprep.subr.bf16.mxu0 0
        %839 = vmatpush2.bf16.msra.mxu0 0
        %840 = vmatprep.subr.bf16.mxu0 0
        %841 = vmatpush2.bf16.msra.mxu0 0
        %842 = vmatprep.subr.bf16.mxu0 0
        %843 = vmatpush2.bf16.msra.mxu0 0
        %844 = vmatprep.subr.bf16.mxu0 0
        %845 = vmatpush2.bf16.msra.mxu0 0
        %846 = vmatprep.subr.bf16.mxu0 0
        %847 = vmatpush2.bf16.msra.mxu0 0
        %848 = vmatprep.subr.bf16.mxu0 0
        %849 = vmatpush2.bf16.msra.mxu0 0
        %850 = vmatprep.subr.bf16.mxu0 0
        %851 = vmatpush2.bf16.msra.mxu0 0
        %852 = vmatprep.subr.bf16.mxu0 0
        %853 = vmatpush2.bf16.msra.mxu0 0
        %854 = vmatprep.mubr.bf16.mxu0 0
        %855 = vmatmul.mubr.bf16.gmra.mxu0 %v806
        %v856 = vpop.f32.mrf.mxu0
        %v857 = vadd.f32 0.0, %v856
        %v858 = vpop.f32.mrf.mxu0
        %v859 = vpop.f32.mrf.mxu0
        %v860 = vadd.f32 0.0, %v859
        %v861 = vpop.f32.mrf.mxu0
        %862 = vmatprep.mubr.bf16.mxu0 0
        %863 = vmatmul.mubr.bf16.gmra.mxu0 %v807
        %v864 = vpop.f32.mrf.mxu0
        %v865 = vadd.f32 0.0, %v864
        %v866 = vpop.f32.mrf.mxu0
        %v867 = vpop.f32.mrf.mxu0
        %v868 = vadd.f32 0.0, %v867
        %v869 = vpop.f32.mrf.mxu0
        %870 = vmatprep.mubr.bf16.mxu0 0
        %871 = vmatmul.mubr.bf16.gmra.mxu0 %v808
        %v872 = vpop.f32.mrf.mxu0
        %v873 = vadd.f32 0.0, %v872
        %v874 = vpop.f32.mrf.mxu0
        %v875 = vpop.f32.mrf.mxu0
        %v876 = vadd.f32 0.0, %v875
        %v877 = vpop.f32.mrf.mxu0
        %878 = vmatprep.mubr.bf16.mxu0 0
        %879 = vmatmul.mubr.bf16.gmra.mxu0 %v809
        %v880 = vpop.f32.mrf.mxu0
        %v881 = vadd.f32 0.0, %v880
        %v882 = vpop.f32.mrf.mxu0
        %v883 = vpop.f32.mrf.mxu0
        %v884 = vadd.f32 0.0, %v883
        %v885 = vpop.f32.mrf.mxu0
        %886 = vmatprep.mubr.bf16.mxu0 0
        %887 = vmatmul.mubr.bf16.gmra.mxu0 %v810
        %v888 = vpop.f32.mrf.mxu0
        %v889 = vadd.f32 0.0, %v888
        %v890 = vpop.f32.mrf.mxu0
        %v891 = vpop.f32.mrf.mxu0
        %v892 = vadd.f32 0.0, %v891
        %v893 = vpop.f32.mrf.mxu0
        %894 = vmatprep.mubr.bf16.mxu0 0
        %895 = vmatmul.mubr.bf16.gmra.mxu0 %v811
        %v896 = vpop.f32.mrf.mxu0
        %v897 = vadd.f32 0.0, %v896
        %v898 = vpop.f32.mrf.mxu0
        %v899 = vpop.f32.mrf.mxu0
        %v900 = vadd.f32 0.0, %v899
        %v901 = vpop.f32.mrf.mxu0
        %902 = vmatprep.mubr.bf16.mxu0 0
        %903 = vmatmul.mubr.bf16.gmra.mxu0 %v812
        %v904 = vpop.f32.mrf.mxu0
        %v905 = vadd.f32 0.0, %v904
        %v906 = vpop.f32.mrf.mxu0
        %v907 = vpop.f32.mrf.mxu0
        %v908 = vadd.f32 0.0, %v907
        %v909 = vpop.f32.mrf.mxu0
        %910 = vmatprep.mubr.bf16.mxu0 0
        %911 = vmatmul.mubr.bf16.gmra.mxu0 %v813
        %v912 = vpop.f32.mrf.mxu0
        %v913 = vadd.f32 0.0, %v912
        %v914 = vpop.f32.mrf.mxu0
        %v915 = vpop.f32.mrf.mxu0
        %v916 = vadd.f32 0.0, %v915
        %v917 = vpop.f32.mrf.mxu0
        %918 = vdwg.mxu0
        %v919 = vld [vmem:[#allocation3] sm:$0xff]
        %v920 = vld [vmem:[#allocation3 + $0x8] sm:$0xff]
        %v921 = vld [vmem:[#allocation3 + $0x10] sm:$0xff]
        %v922 = vld [vmem:[#allocation3 + $0x18] sm:$0xff]
        %v923 = vld [vmem:[#allocation3 + $0x20] sm:$0xff]
        %v924 = vld [vmem:[#allocation3 + $0x28] sm:$0xff]
        %v925 = vld [vmem:[#allocation3 + $0x30] sm:$0xff]
        %v926 = vld [vmem:[#allocation3 + $0x38] sm:$0xff]
        %v927 = vld [vmem:[#allocation3 + $0x40] sm:$0xff]
        %v928 = vld [vmem:[#allocation3 + $0x48] sm:$0xff]
        %v929 = vld [vmem:[#allocation3 + $0x50] sm:$0xff]
        %v930 = vld [vmem:[#allocation3 + $0x58] sm:$0xff]
        %v931 = vld [vmem:[#allocation3 + $0x60] sm:$0xff]
        %v932 = vld [vmem:[#allocation3 + $0x68] sm:$0xff]
        %v933 = vld [vmem:[#allocation3 + $0x70] sm:$0xff]
        %v934 = vld [vmem:[#allocation3 + $0x78] sm:$0xff]
        %936 = vset.pattern.permute.xlu0 0
        %937 = vperm.xlu0 %936, %v919
        %v938 = vpop.permute.xlu0 %937
        %941 = vset.pattern.permute.xlu0 0
        %942 = vperm.xlu0 %941, %v920
        %v943 = vpop.permute.xlu0 %942
        %946 = vset.pattern.permute.xlu0 0
        %947 = vperm.xlu0 %946, %v921
        %v948 = vpop.permute.xlu0 %947
        %951 = vset.pattern.permute.xlu0 0
        %952 = vperm.xlu0 %951, %v922
        %v953 = vpop.permute.xlu0 %952
        %956 = vset.pattern.permute.xlu0 0
        %957 = vperm.xlu0 %956, %v923
        %v958 = vpop.permute.xlu0 %957
        %961 = vset.pattern.permute.xlu0 0
        %962 = vperm.xlu0 %961, %v924
        %v963 = vpop.permute.xlu0 %962
        %966 = vset.pattern.permute.xlu0 0
        %967 = vperm.xlu0 %966, %v925
        %v968 = vpop.permute.xlu0 %967
        %971 = vset.pattern.permute.xlu0 0
        %972 = vperm.xlu0 %971, %v926
        %v973 = vpop.permute.xlu0 %972
        %976 = vset.pattern.permute.xlu0 0
        %977 = vperm.xlu0 %976, %v927
        %v978 = vpop.permute.xlu0 %977
        %981 = vset.pattern.permute.xlu0 0
        %982 = vperm.xlu0 %981, %v928
        %v983 = vpop.permute.xlu0 %982
        %986 = vset.pattern.permute.xlu0 0
        %987 = vperm.xlu0 %986, %v929
        %v988 = vpop.permute.xlu0 %987
        %991 = vset.pattern.permute.xlu0 0
        %992 = vperm.xlu0 %991, %v930
        %v993 = vpop.permute.xlu0 %992
        %996 = vset.pattern.permute.xlu0 0
        %997 = vperm.xlu0 %996, %v931
        %v998 = vpop.permute.xlu0 %997
        %1001 = vset.pattern.permute.xlu0 0
        %1002 = vperm.xlu0 %1001, %v932
        %v1003 = vpop.permute.xlu0 %1002
        %1006 = vset.pattern.permute.xlu0 0
        %1007 = vperm.xlu0 %1006, %v933
        %v1008 = vpop.permute.xlu0 %1007
        %1011 = vset.pattern.permute.xlu0 0
        %1012 = vperm.xlu0 %1011, %v934
        %v1013 = vpop.permute.xlu0 %1012
        %v1015 = vmul.f32 %v857, %v938
        %v1016 = vmul.f32 %v860, %v943
        %v1017 = vmul.f32 %v865, %v948
        %v1018 = vmul.f32 %v868, %v953
        %v1019 = vmul.f32 %v873, %v958
        %v1020 = vmul.f32 %v876, %v963
        %v1021 = vmul.f32 %v881, %v968
        %v1022 = vmul.f32 %v884, %v973
        %v1023 = vmul.f32 %v889, %v978
        %v1024 = vmul.f32 %v892, %v983
        %v1025 = vmul.f32 %v897, %v988
        %v1026 = vmul.f32 %v900, %v993
        %v1027 = vmul.f32 %v905, %v998
        %v1028 = vmul.f32 %v908, %v1003
        %v1029 = vmul.f32 %v913, %v1008
        %v1030 = vmul.f32 %v916, %v1013
        %v1031 = vld [vmem:[%s311] sm:$0x1]
        %v1033 = vlaneseq
        %v1034 = vshrl.u32 %v1033, 7
        %v1035 = vsub.s32 0, %v1034
        %v1036 = vrot.slane %v1031, %v1035
        %v1038 = vadd.f32 %v1015, %v1036
        %v1039 = vadd.f32 %v1016, %v1036
        %v1040 = vadd.f32 %v1017, %v1036
        %v1041 = vadd.f32 %v1018, %v1036
        %v1042 = vadd.f32 %v1019, %v1036
        %v1043 = vadd.f32 %v1020, %v1036
        %v1044 = vadd.f32 %v1021, %v1036
        %v1045 = vadd.f32 %v1022, %v1036
        %v1046 = vadd.f32 %v1023, %v1036
        %v1047 = vadd.f32 %v1024, %v1036
        %v1048 = vadd.f32 %v1025, %v1036
        %v1049 = vadd.f32 %v1026, %v1036
        %v1050 = vadd.f32 %v1027, %v1036
        %v1051 = vadd.f32 %v1028, %v1036
        %v1052 = vadd.f32 %v1029, %v1036
        %v1053 = vadd.f32 %v1030, %v1036
        %1054 = vst [vmem:[%s307] sm:$0xff] %v1038
        %1055 = vst [vmem:[%s307 + $0x8] sm:$0xff] %v1039
        %1056 = vst [vmem:[%s307 + $0x10] sm:$0xff] %v1040
        %1057 = vst [vmem:[%s307 + $0x18] sm:$0xff] %v1041
        %1058 = vst [vmem:[%s307 + $0x20] sm:$0xff] %v1042
        %1059 = vst [vmem:[%s307 + $0x28] sm:$0xff] %v1043
        %1060 = vst [vmem:[%s307 + $0x30] sm:$0xff] %v1044
        %1061 = vst [vmem:[%s307 + $0x38] sm:$0xff] %v1045
        %1062 = vst [vmem:[%s307 + $0x40] sm:$0xff] %v1046
        %1063 = vst [vmem:[%s307 + $0x48] sm:$0xff] %v1047
        %1064 = vst [vmem:[%s307 + $0x50] sm:$0xff] %v1048
        %1065 = vst [vmem:[%s307 + $0x58] sm:$0xff] %v1049
        %1066 = vst [vmem:[%s307 + $0x60] sm:$0xff] %v1050
        %1067 = vst [vmem:[%s307 + $0x68] sm:$0xff] %v1051
        %1068 = vst [vmem:[%s307 + $0x70] sm:$0xff] %v1052
        %1069 = vst [vmem:[%s307 + $0x78] sm:$0xff] %v1053
        %s1070 = sand.u32 %s168, 1
        %s1071 = scalar_lea.sflag [#allocation7], %s1070
        %s1072 = sand.u32 %s168, 1
        %s1073 = smul.addr %s1072, 128
        %s1074 = scalar_lea.vmem [#allocation10], %s1073
        // Predicated region
        $region53: #{tpu_custom_call.1} parent=39 // pred_check
          %p1075 = pneg %p178
        $region54: #{tpu_custom_call.1} parent=39 // pred_check_branch
          %1077 = sbr.rel (%p1075) target = $region56
        $region55: #{tpu_custom_call.1} parent=39 // pred_region
          %s1078 = smul.u32 16, %s30
          %s1080 = ssub.s32 2048, 2048
          %1081 = vsyncadd %s1071, %s1080
          %s1082 = smul.addr %s1078, 2
          %s1083 = sadd.s32 %s31, %s1082
          %s1084 = smul.addr %s1083, 128
          %s1085 = scalar_lea.hbm %s5, %s1084
          %s1086 = sshll.u32 %s1074, 4
          %s1087 = int_to_ptr.vmem [resolvable:$true] %s1086
          %1092 = dma.vmem_to_hbm [thread:$0]  %s1087, 2048, %s1085, %s1071, 128, 256, 8
        $region56: #{tpu_custom_call.1} parent=39 // pred_fallthru
          _
      $region40: #{tpu_custom_call.1} parent=5 // pred_fallthru
        _
      %p1093 = scmp.le.s32.totalorder 2, %s21
      // Predicated region
      $region57: #{tpu_custom_call.1} parent=5 // pred_check
        %p1094 = pneg %p1093
      $region58: #{tpu_custom_call.1} parent=5 // pred_check_branch
        %1096 = sbr.rel (%p1094) target = $region60
      $region59: #{tpu_custom_call.1} parent=5 // pred_region
        %s1097 = ssub.s32 %s21, 2
        // Predicated region
        $region61: #{tpu_custom_call.1} parent=59 // pred_check
          %p1098 = pneg %p184
        $region62: #{tpu_custom_call.1} parent=59 // pred_check_branch
          %1100 = sbr.rel (%p1098) target = $region64
        $region63: #{tpu_custom_call.1} parent=59 // pred_region
          %s1101 = sand.u32 %s169, 1
          %s1102 = scalar_lea.sflag [#allocation7], %s1101
          %s1103 = sand.u32 %s169, 1
          %s1104 = smul.addr %s1103, 128
          %s1105 = scalar_lea.vmem [#allocation10], %s1104
          %1106 = dma.done %s1102, 2048
        $region64: #{tpu_custom_call.1} parent=59 // pred_fallthru
          _
      $region60: #{tpu_custom_call.1} parent=5 // pred_fallthru
        _
    $region6: #{tpu_custom_call.1} parent=1 // loop_footer
      %s25 = sadd.s32 1, %s21
    $region7: #{tpu_custom_call.1} parent=1 // loop_footer_branch
      %20 = sbr.rel target = $region3
    $region8: #{tpu_custom_call.1} parent=1 // loop_exit
      _
    %1107 = vsyncpa [#allocation6], 1
    %s1108 = scalar_lea.sflag [#allocation6], 1
    %1109 = vsyncpa %s1108, 1
    %1110 = vsyncpa [#allocation9], 1
    %s1111 = scalar_lea.sflag [#allocation9], 1
    %1112 = vsyncpa %s1111, 1
    %1113 = vsyncpa [#allocation7], 1
    %s1114 = scalar_lea.sflag [#allocation7], 1
    %1115 = vsyncpa %s1114, 1

</llo_original>
